<compile_context>
chip_gen: v7x
topology: tpu7x:2x2x1
jax: 0.10.0
libtpu: 0.0.40
codegen_flags: <defaults>
</compile_context>

<pallas_src>
import math

import jax
import jax.numpy as jnp
from jax import lax
from jax.experimental import pallas as pl
from jax.experimental.pallas import tpu as pltpu

# ---- small LlamaConfig-like constants -------------------------------------
SEQ_LEN = 8
HIDDEN = 32
NUM_HEADS = 4
HEAD_DIM = HIDDEN // NUM_HEADS
HALF = HEAD_DIM // 2
ROPE_THETA = 10000.0

LANES = 128              # TPU lane width; every kernel operand is padded to it
ROT_SHIFT = LANES // 2   # rotate-half == half-axis lane roll in the packed layout


# ---- Pallas kernel ---------------------------------------------------------
def mha_kernel(x_ref, wqkv_ref, wo_ref, cos_ref, sin_ref, out_ref):
    # Fused Q/K/V projection: one lane-dense bf16 MXU matmul, f32 accumulate.
    qkv = jnp.dot(x_ref[...], wqkv_ref[...],
                  preferred_element_type=jnp.float32)            # (S, 3*128) f32

    q = qkv[:, 0 * LANES:1 * LANES]      # 128-lane-aligned slices (no masking)
    k = qkv[:, 1 * LANES:2 * LANES]
    v = qkv[:, 2 * LANES:3 * LANES]

    # RoPE (rotate-half): one half-axis lane roll on the XLU + VPU multiplies.
    # The wrapper packs q/k head-dims so first halves sit in lanes [0,16) and
    # second halves in lanes [64,80); the rotate-half sign is folded into sin.
    cos = cos_ref[...]
    sin = sin_ref[...]
    q = q * cos + pltpu.roll(q, shift=ROT_SHIFT, axis=1) * sin
    k = k * cos + pltpu.roll(k, shift=ROT_SHIFT, axis=1) * sin

    S = out_ref.shape[0]
    row = lax.broadcasted_iota(jnp.int32, (S, S), 0)
    col = lax.broadcasted_iota(jnp.int32, (S, S), 1)
    causal = row >= col
    scale = 1.0 / math.sqrt(HEAD_DIM)

    lane = lax.broadcasted_iota(jnp.int32, (1, LANES), 1)
    q_bf = q.astype(jnp.bfloat16)

    acc = jnp.zeros((S, LANES), dtype=jnp.float32)
    for h in range(NUM_HEADS):                       # static, unrolled (4)
        # head-h lanes in the rotated q/k layout: {4h..4h+3} U {64+4h..64+4h+3}
        qk_sel = (((lane >= h * HALF) & (lane < (h + 1) * HALF)) |
                  ((lane >= ROT_SHIFT + h * HALF) &
                   (lane < ROT_SHIFT + (h + 1) * HALF)))
        kh = jnp.where(qk_sel, k, 0.0).astype(jnp.bfloat16)       # (S, 128)

        # scores: contract the lane axis of both operands (no transpose).
        s = lax.dot_general(q_bf, kh, (((1,), (1,)), ((), ())),
                            preferred_element_type=jnp.float32) * scale  # (S, S)
        s = jnp.where(causal, s, -1e30)      # scores stay f32 -> constant safe
        m = jnp.max(s, axis=-1, keepdims=True)
        e = jnp.exp(s - m)
        p = e * pl.reciprocal(jnp.sum(e, axis=-1, keepdims=True), approx=True)

        # head-h lanes of v (natural layout): {8h .. 8h+7}
        v_sel = (lane >= h * HEAD_DIM) & (lane < (h + 1) * HEAD_DIM)
        vh = jnp.where(v_sel, v, 0.0).astype(jnp.bfloat16)        # (S, 128)
        # heads land in disjoint lanes -> accumulation == concat(heads).
        acc = acc + jnp.dot(p.astype(jnp.bfloat16), vh,
                            preferred_element_type=jnp.float32)   # (S, 128)

    # output projection over the full 128-lane slab (padded wo rows are zero).
    out = jnp.dot(acc.astype(jnp.bfloat16), wo_ref[...],
                  preferred_element_type=jnp.float32)             # (S, 128)
    out_ref[...] = out.astype(out_ref.dtype)                      # dense store


# ---- wrapper-side packing ---------------------------------------------------
def _natural_rope_tables(seq_len):
    pos = jnp.arange(seq_len, dtype=jnp.float32)
    inv_freq = 1.0 / (ROPE_THETA ** (
        jnp.arange(0, HEAD_DIM, 2, dtype=jnp.float32) / HEAD_DIM))
    freqs = jnp.outer(pos, inv_freq)                     # (S, HALF)
    emb = jnp.concatenate([freqs, freqs], axis=-1)       # (S, HEAD_DIM)
    cos = jnp.tile(jnp.cos(emb), (1, NUM_HEADS))         # (S, HIDDEN)
    sin = jnp.tile(jnp.sin(emb), (1, NUM_HEADS))
    return cos, sin


def _qk_lane_permutation():
    # natural q/k column 8h+j (first half) -> lane 4h+j
    # natural q/k column 8h+4+j (second half) -> lane 64+4h+j
    idx = []
    for h in range(NUM_HEADS):
        for j in range(HALF):
            idx.append(h * HALF + j)
        for j in range(HALF):
            idx.append(ROT_SHIFT + h * HALF + j)
    return jnp.array(idx, dtype=jnp.int32)               # (HIDDEN,)


def _pack_operands(x, wq_t, wk_t, wv_t, wo_t):
    S = x.shape[0]
    perm = _qk_lane_permutation()

    def scatter_cols(w, cols):
        return jnp.zeros((LANES, LANES), jnp.float32).at[:HIDDEN, cols].set(w)

    wq_s = scatter_cols(wq_t, perm)                      # rotated q/k layout
    wk_s = scatter_cols(wk_t, perm)
    wv_s = scatter_cols(wv_t, jnp.arange(HIDDEN))        # natural v layout
    wqkv = jnp.concatenate([wq_s, wk_s, wv_s], axis=1).astype(jnp.bfloat16)

    wo_pad = (jnp.zeros((LANES, LANES), jnp.float32)
              .at[:HIDDEN, :HIDDEN].set(wo_t).astype(jnp.bfloat16))

    cos_nat, sin_nat = _natural_rope_tables(S)
    sign = jnp.tile(jnp.concatenate([-jnp.ones(HALF, jnp.float32),
                                     jnp.ones(HALF, jnp.float32)]), (NUM_HEADS,))
    cos_pad = jnp.zeros((S, LANES), jnp.float32).at[:, perm].set(cos_nat)
    sin_pad = jnp.zeros((S, LANES), jnp.float32).at[:, perm].set(sin_nat * sign)

    x_pad = (jnp.zeros((S, LANES), jnp.float32)
             .at[:, :HIDDEN].set(x).astype(jnp.bfloat16))
    return x_pad, wqkv, wo_pad, cos_pad, sin_pad


def multi_head_attention(x, wq_t, wk_t, wv_t, wo_t):
    S = x.shape[0]
    x_pad, wqkv, wo_pad, cos_pad, sin_pad = _pack_operands(
        x, wq_t, wk_t, wv_t, wo_t)

    vmem = pl.BlockSpec(memory_space=pltpu.MemorySpace.VMEM)
    out_pad = pl.pallas_call(
        mha_kernel,
        out_shape=jax.ShapeDtypeStruct((S, LANES), jnp.float32),
        in_specs=[vmem, vmem, vmem, vmem, vmem],
        out_specs=vmem,
    )(x_pad, wqkv, wo_pad, cos_pad, sin_pad)
    return out_pad[:, :HIDDEN]                           # strip lane padding


# ---- pure-JAX reference (original f32 semantics, natural layout) -----------
def reference(x, wq_t, wk_t, wv_t, wo_t):
    S, H = x.shape
    cos, sin = _natural_rope_tables(S)
    q = x @ wq_t
    k = x @ wk_t
    v = x @ wv_t

    def rotate_half(t):
        t3 = t.reshape(S, NUM_HEADS, HEAD_DIM)
        rh = jnp.concatenate([-t3[..., HALF:], t3[..., :HALF]], axis=-1)
        return rh.reshape(S, H)

    q = q * cos + rotate_half(q) * sin
    k = k * cos + rotate_half(k) * sin

    row = jnp.arange(S)[:, None]
    col = jnp.arange(S)[None, :]
    causal = row >= col
    scale = 1.0 / math.sqrt(HEAD_DIM)
    out = jnp.zeros((S, H), jnp.float32)
    for h in range(NUM_HEADS):
        sl = slice(h * HEAD_DIM, (h + 1) * HEAD_DIM)
        s = (q[:, sl] @ k[:, sl].T) * scale
        s = jnp.where(causal, s, -1e30)
        p = jax.nn.softmax(s, axis=-1)
        out = out + (p @ v[:, sl]) @ wo_t[sl, :]
    return out


if __name__ == "__main__":
    key = jax.random.PRNGKey(0)
    kx, kq, kk, kv, ko = jax.random.split(key, 5)

    x = jax.random.normal(kx, (SEQ_LEN, HIDDEN), dtype=jnp.float32)
    # nn.Linear weight is (out, in); we store the transpose (in, out) directly.
    wq_t = 0.05 * jax.random.normal(kq, (HIDDEN, HIDDEN), dtype=jnp.float32)
    wk_t = 0.05 * jax.random.normal(kk, (HIDDEN, HIDDEN), dtype=jnp.float32)
    wv_t = 0.05 * jax.random.normal(kv, (HIDDEN, HIDDEN), dtype=jnp.float32)
    wo_t = 0.05 * jax.random.normal(ko, (HIDDEN, HIDDEN), dtype=jnp.float32)

    out = multi_head_attention(x, wq_t, wk_t, wv_t, wo_t)
    out = jax.block_until_ready(out)

    ref = reference(x, wq_t, wk_t, wv_t, wo_t)
    assert out.shape == (SEQ_LEN, HIDDEN)
    # bf16 MXU operands + approx reciprocal -> relaxed tolerance vs f32 ref.
    assert jnp.allclose(out, ref, atol=2e-2, rtol=2e-2), "mismatch vs reference"

    print("KERNEL_OK")
</pallas_src>

<mosaic_0001>
module attributes {stable_mosaic.version = 11 : i64} {
  func.func @mha_kernel(%arg0: memref<8x128xbf16, #tpu.memory_space<vmem>>, %arg1: memref<128x384xbf16, #tpu.memory_space<vmem>>, %arg2: memref<128x128xbf16, #tpu.memory_space<vmem>>, %arg3: memref<8x128xf32, #tpu.memory_space<vmem>>, %arg4: memref<8x128xf32, #tpu.memory_space<vmem>>, %arg5: memref<8x128xf32, #tpu.memory_space<vmem>>) attributes {dimension_semantics = [], scalar_prefetch = 0 : i64, scratch_operands = 0 : i64, tpu.core_type = #tpu.core_type<tc>} {
    %c0 = arith.constant 0 : index
    %c0_0 = arith.constant 0 : index
    %0 = vector.load %arg0[%c0, %c0_0] : memref<8x128xbf16, #tpu.memory_space<vmem>>, vector<8x128xbf16>
    %c0_1 = arith.constant 0 : index
    %c0_2 = arith.constant 0 : index
    %1 = vector.load %arg1[%c0_1, %c0_2] : memref<128x384xbf16, #tpu.memory_space<vmem>>, vector<128x384xbf16>
    %cst = arith.constant dense<0.000000e+00> : vector<8x384xf32>
    %2 = tpu.matmul %0, %1, %cst {dimension_numbers = #tpu.dot_dimension_numbers<[1], [0], [0], [1], [0, 0, 1, 1], [], []>} : vector<8x128xbf16>, vector<128x384xbf16>, vector<8x384xf32> -> vector<8x384xf32>
    %3 = vector.extract_strided_slice %2 {offsets = [0, 0], sizes = [8, 128], strides = [1, 1]} : vector<8x384xf32> to vector<8x128xf32>
    %4 = vector.extract_strided_slice %2 {offsets = [0, 128], sizes = [8, 128], strides = [1, 1]} : vector<8x384xf32> to vector<8x128xf32>
    %5 = vector.extract_strided_slice %2 {offsets = [0, 256], sizes = [8, 128], strides = [1, 1]} : vector<8x384xf32> to vector<8x128xf32>
    %c0_3 = arith.constant 0 : index
    %c0_4 = arith.constant 0 : index
    %6 = vector.load %arg3[%c0_3, %c0_4] : memref<8x128xf32, #tpu.memory_space<vmem>>, vector<8x128xf32>
    %c0_5 = arith.constant 0 : index
    %c0_6 = arith.constant 0 : index
    %7 = vector.load %arg4[%c0_5, %c0_6] : memref<8x128xf32, #tpu.memory_space<vmem>>, vector<8x128xf32>
    %8 = arith.mulf %3, %6 : vector<8x128xf32>
    %c64_i32 = arith.constant 64 : i32
    %9 = tpu.dynamic_rotate %3 by %c64_i32 dim 1 : vector<8x128xf32>, i32 -> vector<8x128xf32>
    %10 = arith.mulf %9, %7 : vector<8x128xf32>
    %11 = arith.addf %8, %10 : vector<8x128xf32>
    %12 = arith.mulf %4, %6 : vector<8x128xf32>
    %c64_i32_7 = arith.constant 64 : i32
    %13 = tpu.dynamic_rotate %4 by %c64_i32_7 dim 1 : vector<8x128xf32>, i32 -> vector<8x128xf32>
    %14 = arith.mulf %13, %7 : vector<8x128xf32>
    %15 = arith.addf %12, %14 : vector<8x128xf32>
    %16 = tpu.iota {dimensions = array<i32: 0>} : vector<8x8xi32>
    %17 = tpu.iota {dimensions = array<i32: 1>} : vector<8x8xi32>
    %18 = arith.cmpi sge, %16, %17 : vector<8x8xi32>
    %19 = tpu.iota {dimensions = array<i32: 1>} : vector<1x128xi32>
    %20 = arith.truncf %11 : vector<8x128xf32> to vector<8x128xbf16>
    %cst_8 = arith.constant 0.000000e+00 : f32
    %21 = vector.broadcast %cst_8 : f32 to vector<8x128xf32>
    %c0_i32 = arith.constant 0 : i32
    %22 = vector.broadcast %c0_i32 : i32 to vector<1x128xi32>
    %23 = arith.cmpi sge, %19, %22 : vector<1x128xi32>
    %c4_i32 = arith.constant 4 : i32
    %24 = vector.broadcast %c4_i32 : i32 to vector<1x128xi32>
    %25 = arith.cmpi slt, %19, %24 : vector<1x128xi32>
    %26 = arith.andi %23, %25 : vector<1x128xi1>
    %c64_i32_9 = arith.constant 64 : i32
    %27 = vector.broadcast %c64_i32_9 : i32 to vector<1x128xi32>
    %28 = arith.cmpi sge, %19, %27 : vector<1x128xi32>
    %c68_i32 = arith.constant 68 : i32
    %29 = vector.broadcast %c68_i32 : i32 to vector<1x128xi32>
    %30 = arith.cmpi slt, %19, %29 : vector<1x128xi32>
    %31 = arith.andi %28, %30 : vector<1x128xi1>
    %32 = arith.ori %26, %31 : vector<1x128xi1>
    %cst_10 = arith.constant 0.000000e+00 : f32
    %33 = vector.shape_cast %32 : vector<1x128xi1> to vector<1x128xi1>
    %34 = vector.broadcast %33 : vector<1x128xi1> to vector<8x128xi1>
    %35 = vector.broadcast %cst_10 : f32 to vector<8x128xf32>
    %36 = arith.select %34, %15, %35 : vector<8x128xi1>, vector<8x128xf32>
    %37 = arith.truncf %36 : vector<8x128xf32> to vector<8x128xbf16>
    %cst_11 = arith.constant dense<0.000000e+00> : vector<8x8xf32>
    %38 = tpu.matmul %20, %37, %cst_11 {dimension_numbers = #tpu.dot_dimension_numbers<[1], [1], [0], [0], [0, 0, 1, 0], [], []>} : vector<8x128xbf16>, vector<8x128xbf16>, vector<8x8xf32> -> vector<8x8xf32>
    %cst_12 = arith.constant 0.353553385 : f32
    %39 = vector.broadcast %cst_12 : f32 to vector<8x8xf32>
    %40 = arith.mulf %38, %39 : vector<8x8xf32>
    %cst_13 = arith.constant -1.000000e+30 : f32
    %41 = vector.broadcast %cst_13 : f32 to vector<8x8xf32>
    %42 = arith.select %18, %40, %41 : vector<8x8xi1>, vector<8x8xf32>
    %cst_14 = arith.constant dense<0xFF800000> : vector<8xf32>
    %43 = vector.multi_reduction <maximumf>, %42, %cst_14 [1] : vector<8x8xf32> to vector<8xf32>
    %44 = vector.shape_cast %43 : vector<8xf32> to vector<8x1xf32>
    %45 = vector.broadcast %44 : vector<8x1xf32> to vector<8x8xf32>
    %46 = arith.subf %42, %45 : vector<8x8xf32>
    %47 = math.exp %46 : vector<8x8xf32>
    %cst_15 = arith.constant dense<0.000000e+00> : vector<8xf32>
    %48 = vector.multi_reduction <add>, %47, %cst_15 [1] : vector<8x8xf32> to vector<8xf32>
    %49 = vector.shape_cast %48 : vector<8xf32> to vector<8x1xf32>
    %50 = tpu.reciprocal %49 {approx = true} : vector<8x1xf32> -> vector<8x1xf32>
    %51 = vector.broadcast %50 : vector<8x1xf32> to vector<8x8xf32>
    %52 = arith.mulf %47, %51 : vector<8x8xf32>
    %c0_i32_16 = arith.constant 0 : i32
    %53 = vector.broadcast %c0_i32_16 : i32 to vector<1x128xi32>
    %54 = arith.cmpi sge, %19, %53 : vector<1x128xi32>
    %c8_i32 = arith.constant 8 : i32
    %55 = vector.broadcast %c8_i32 : i32 to vector<1x128xi32>
    %56 = arith.cmpi slt, %19, %55 : vector<1x128xi32>
    %57 = arith.andi %54, %56 : vector<1x128xi1>
    %cst_17 = arith.constant 0.000000e+00 : f32
    %58 = vector.shape_cast %57 : vector<1x128xi1> to vector<1x128xi1>
    %59 = vector.broadcast %58 : vector<1x128xi1> to vector<8x128xi1>
    %60 = vector.broadcast %cst_17 : f32 to vector<8x128xf32>
    %61 = arith.select %59, %5, %60 : vector<8x128xi1>, vector<8x128xf32>
    %62 = arith.truncf %61 : vector<8x128xf32> to vector<8x128xbf16>
    %63 = arith.truncf %52 : vector<8x8xf32> to vector<8x8xbf16>
    %cst_18 = arith.constant dense<0.000000e+00> : vector<8x128xf32>
    %64 = tpu.matmul %63, %62, %cst_18 {dimension_numbers = #tpu.dot_dimension_numbers<[1], [0], [0], [1], [0, 0, 1, 1], [], []>} : vector<8x8xbf16>, vector<8x128xbf16>, vector<8x128xf32> -> vector<8x128xf32>
    %65 = arith.addf %21, %64 : vector<8x128xf32>
    %c4_i32_19 = arith.constant 4 : i32
    %66 = vector.broadcast %c4_i32_19 : i32 to vector<1x128xi32>
    %67 = arith.cmpi sge, %19, %66 : vector<1x128xi32>
    %c8_i32_20 = arith.constant 8 : i32
    %68 = vector.broadcast %c8_i32_20 : i32 to vector<1x128xi32>
    %69 = arith.cmpi slt, %19, %68 : vector<1x128xi32>
    %70 = arith.andi %67, %69 : vector<1x128xi1>
    %c68_i32_21 = arith.constant 68 : i32
    %71 = vector.broadcast %c68_i32_21 : i32 to vector<1x128xi32>
    %72 = arith.cmpi sge, %19, %71 : vector<1x128xi32>
    %c72_i32 = arith.constant 72 : i32
    %73 = vector.broadcast %c72_i32 : i32 to vector<1x128xi32>
    %74 = arith.cmpi slt, %19, %73 : vector<1x128xi32>
    %75 = arith.andi %72, %74 : vector<1x128xi1>
    %76 = arith.ori %70, %75 : vector<1x128xi1>
    %cst_22 = arith.constant 0.000000e+00 : f32
    %77 = vector.shape_cast %76 : vector<1x128xi1> to vector<1x128xi1>
    %78 = vector.broadcast %77 : vector<1x128xi1> to vector<8x128xi1>
    %79 = vector.broadcast %cst_22 : f32 to vector<8x128xf32>
    %80 = arith.select %78, %15, %79 : vector<8x128xi1>, vector<8x128xf32>
    %81 = arith.truncf %80 : vector<8x128xf32> to vector<8x128xbf16>
    %cst_23 = arith.constant dense<0.000000e+00> : vector<8x8xf32>
    %82 = tpu.matmul %20, %81, %cst_23 {dimension_numbers = #tpu.dot_dimension_numbers<[1], [1], [0], [0], [0, 0, 1, 0], [], []>} : vector<8x128xbf16>, vector<8x128xbf16>, vector<8x8xf32> -> vector<8x8xf32>
    %cst_24 = arith.constant 0.353553385 : f32
    %83 = vector.broadcast %cst_24 : f32 to vector<8x8xf32>
    %84 = arith.mulf %82, %83 : vector<8x8xf32>
    %cst_25 = arith.constant -1.000000e+30 : f32
    %85 = vector.broadcast %cst_25 : f32 to vector<8x8xf32>
    %86 = arith.select %18, %84, %85 : vector<8x8xi1>, vector<8x8xf32>
    %cst_26 = arith.constant dense<0xFF800000> : vector<8xf32>
    %87 = vector.multi_reduction <maximumf>, %86, %cst_26 [1] : vector<8x8xf32> to vector<8xf32>
    %88 = vector.shape_cast %87 : vector<8xf32> to vector<8x1xf32>
    %89 = vector.broadcast %88 : vector<8x1xf32> to vector<8x8xf32>
    %90 = arith.subf %86, %89 : vector<8x8xf32>
    %91 = math.exp %90 : vector<8x8xf32>
    %cst_27 = arith.constant dense<0.000000e+00> : vector<8xf32>
    %92 = vector.multi_reduction <add>, %91, %cst_27 [1] : vector<8x8xf32> to vector<8xf32>
    %93 = vector.shape_cast %92 : vector<8xf32> to vector<8x1xf32>
    %94 = tpu.reciprocal %93 {approx = true} : vector<8x1xf32> -> vector<8x1xf32>
    %95 = vector.broadcast %94 : vector<8x1xf32> to vector<8x8xf32>
    %96 = arith.mulf %91, %95 : vector<8x8xf32>
    %c8_i32_28 = arith.constant 8 : i32
    %97 = vector.broadcast %c8_i32_28 : i32 to vector<1x128xi32>
    %98 = arith.cmpi sge, %19, %97 : vector<1x128xi32>
    %c16_i32 = arith.constant 16 : i32
    %99 = vector.broadcast %c16_i32 : i32 to vector<1x128xi32>
    %100 = arith.cmpi slt, %19, %99 : vector<1x128xi32>
    %101 = arith.andi %98, %100 : vector<1x128xi1>
    %cst_29 = arith.constant 0.000000e+00 : f32
    %102 = vector.shape_cast %101 : vector<1x128xi1> to vector<1x128xi1>
    %103 = vector.broadcast %102 : vector<1x128xi1> to vector<8x128xi1>
    %104 = vector.broadcast %cst_29 : f32 to vector<8x128xf32>
    %105 = arith.select %103, %5, %104 : vector<8x128xi1>, vector<8x128xf32>
    %106 = arith.truncf %105 : vector<8x128xf32> to vector<8x128xbf16>
    %107 = arith.truncf %96 : vector<8x8xf32> to vector<8x8xbf16>
    %cst_30 = arith.constant dense<0.000000e+00> : vector<8x128xf32>
    %108 = tpu.matmul %107, %106, %cst_30 {dimension_numbers = #tpu.dot_dimension_numbers<[1], [0], [0], [1], [0, 0, 1, 1], [], []>} : vector<8x8xbf16>, vector<8x128xbf16>, vector<8x128xf32> -> vector<8x128xf32>
    %109 = arith.addf %65, %108 : vector<8x128xf32>
    %c8_i32_31 = arith.constant 8 : i32
    %110 = vector.broadcast %c8_i32_31 : i32 to vector<1x128xi32>
    %111 = arith.cmpi sge, %19, %110 : vector<1x128xi32>
    %c12_i32 = arith.constant 12 : i32
    %112 = vector.broadcast %c12_i32 : i32 to vector<1x128xi32>
    %113 = arith.cmpi slt, %19, %112 : vector<1x128xi32>
    %114 = arith.andi %111, %113 : vector<1x128xi1>
    %c72_i32_32 = arith.constant 72 : i32
    %115 = vector.broadcast %c72_i32_32 : i32 to vector<1x128xi32>
    %116 = arith.cmpi sge, %19, %115 : vector<1x128xi32>
    %c76_i32 = arith.constant 76 : i32
    %117 = vector.broadcast %c76_i32 : i32 to vector<1x128xi32>
    %118 = arith.cmpi slt, %19, %117 : vector<1x128xi32>
    %119 = arith.andi %116, %118 : vector<1x128xi1>
    %120 = arith.ori %114, %119 : vector<1x128xi1>
    %cst_33 = arith.constant 0.000000e+00 : f32
    %121 = vector.shape_cast %120 : vector<1x128xi1> to vector<1x128xi1>
    %122 = vector.broadcast %121 : vector<1x128xi1> to vector<8x128xi1>
    %123 = vector.broadcast %cst_33 : f32 to vector<8x128xf32>
    %124 = arith.select %122, %15, %123 : vector<8x128xi1>, vector<8x128xf32>
    %125 = arith.truncf %124 : vector<8x128xf32> to vector<8x128xbf16>
    %cst_34 = arith.constant dense<0.000000e+00> : vector<8x8xf32>
    %126 = tpu.matmul %20, %125, %cst_34 {dimension_numbers = #tpu.dot_dimension_numbers<[1], [1], [0], [0], [0, 0, 1, 0], [], []>} : vector<8x128xbf16>, vector<8x128xbf16>, vector<8x8xf32> -> vector<8x8xf32>
    %cst_35 = arith.constant 0.353553385 : f32
    %127 = vector.broadcast %cst_35 : f32 to vector<8x8xf32>
    %128 = arith.mulf %126, %127 : vector<8x8xf32>
    %cst_36 = arith.constant -1.000000e+30 : f32
    %129 = vector.broadcast %cst_36 : f32 to vector<8x8xf32>
    %130 = arith.select %18, %128, %129 : vector<8x8xi1>, vector<8x8xf32>
    %cst_37 = arith.constant dense<0xFF800000> : vector<8xf32>
    %131 = vector.multi_reduction <maximumf>, %130, %cst_37 [1] : vector<8x8xf32> to vector<8xf32>
    %132 = vector.shape_cast %131 : vector<8xf32> to vector<8x1xf32>
    %133 = vector.broadcast %132 : vector<8x1xf32> to vector<8x8xf32>
    %134 = arith.subf %130, %133 : vector<8x8xf32>
    %135 = math.exp %134 : vector<8x8xf32>
    %cst_38 = arith.constant dense<0.000000e+00> : vector<8xf32>
    %136 = vector.multi_reduction <add>, %135, %cst_38 [1] : vector<8x8xf32> to vector<8xf32>
    %137 = vector.shape_cast %136 : vector<8xf32> to vector<8x1xf32>
    %138 = tpu.reciprocal %137 {approx = true} : vector<8x1xf32> -> vector<8x1xf32>
    %139 = vector.broadcast %138 : vector<8x1xf32> to vector<8x8xf32>
    %140 = arith.mulf %135, %139 : vector<8x8xf32>
    %c16_i32_39 = arith.constant 16 : i32
    %141 = vector.broadcast %c16_i32_39 : i32 to vector<1x128xi32>
    %142 = arith.cmpi sge, %19, %141 : vector<1x128xi32>
    %c24_i32 = arith.constant 24 : i32
    %143 = vector.broadcast %c24_i32 : i32 to vector<1x128xi32>
    %144 = arith.cmpi slt, %19, %143 : vector<1x128xi32>
    %145 = arith.andi %142, %144 : vector<1x128xi1>
    %cst_40 = arith.constant 0.000000e+00 : f32
    %146 = vector.shape_cast %145 : vector<1x128xi1> to vector<1x128xi1>
    %147 = vector.broadcast %146 : vector<1x128xi1> to vector<8x128xi1>
    %148 = vector.broadcast %cst_40 : f32 to vector<8x128xf32>
    %149 = arith.select %147, %5, %148 : vector<8x128xi1>, vector<8x128xf32>
    %150 = arith.truncf %149 : vector<8x128xf32> to vector<8x128xbf16>
    %151 = arith.truncf %140 : vector<8x8xf32> to vector<8x8xbf16>
    %cst_41 = arith.constant dense<0.000000e+00> : vector<8x128xf32>
    %152 = tpu.matmul %151, %150, %cst_41 {dimension_numbers = #tpu.dot_dimension_numbers<[1], [0], [0], [1], [0, 0, 1, 1], [], []>} : vector<8x8xbf16>, vector<8x128xbf16>, vector<8x128xf32> -> vector<8x128xf32>
    %153 = arith.addf %109, %152 : vector<8x128xf32>
    %c12_i32_42 = arith.constant 12 : i32
    %154 = vector.broadcast %c12_i32_42 : i32 to vector<1x128xi32>
    %155 = arith.cmpi sge, %19, %154 : vector<1x128xi32>
    %c16_i32_43 = arith.constant 16 : i32
    %156 = vector.broadcast %c16_i32_43 : i32 to vector<1x128xi32>
    %157 = arith.cmpi slt, %19, %156 : vector<1x128xi32>
    %158 = arith.andi %155, %157 : vector<1x128xi1>
    %c76_i32_44 = arith.constant 76 : i32
    %159 = vector.broadcast %c76_i32_44 : i32 to vector<1x128xi32>
    %160 = arith.cmpi sge, %19, %159 : vector<1x128xi32>
    %c80_i32 = arith.constant 80 : i32
    %161 = vector.broadcast %c80_i32 : i32 to vector<1x128xi32>
    %162 = arith.cmpi slt, %19, %161 : vector<1x128xi32>
    %163 = arith.andi %160, %162 : vector<1x128xi1>
    %164 = arith.ori %158, %163 : vector<1x128xi1>
    %cst_45 = arith.constant 0.000000e+00 : f32
    %165 = vector.shape_cast %164 : vector<1x128xi1> to vector<1x128xi1>
    %166 = vector.broadcast %165 : vector<1x128xi1> to vector<8x128xi1>
    %167 = vector.broadcast %cst_45 : f32 to vector<8x128xf32>
    %168 = arith.select %166, %15, %167 : vector<8x128xi1>, vector<8x128xf32>
    %169 = arith.truncf %168 : vector<8x128xf32> to vector<8x128xbf16>
    %cst_46 = arith.constant dense<0.000000e+00> : vector<8x8xf32>
    %170 = tpu.matmul %20, %169, %cst_46 {dimension_numbers = #tpu.dot_dimension_numbers<[1], [1], [0], [0], [0, 0, 1, 0], [], []>} : vector<8x128xbf16>, vector<8x128xbf16>, vector<8x8xf32> -> vector<8x8xf32>
    %cst_47 = arith.constant 0.353553385 : f32
    %171 = vector.broadcast %cst_47 : f32 to vector<8x8xf32>
    %172 = arith.mulf %170, %171 : vector<8x8xf32>
    %cst_48 = arith.constant -1.000000e+30 : f32
    %173 = vector.broadcast %cst_48 : f32 to vector<8x8xf32>
    %174 = arith.select %18, %172, %173 : vector<8x8xi1>, vector<8x8xf32>
    %cst_49 = arith.constant dense<0xFF800000> : vector<8xf32>
    %175 = vector.multi_reduction <maximumf>, %174, %cst_49 [1] : vector<8x8xf32> to vector<8xf32>
    %176 = vector.shape_cast %175 : vector<8xf32> to vector<8x1xf32>
    %177 = vector.broadcast %176 : vector<8x1xf32> to vector<8x8xf32>
    %178 = arith.subf %174, %177 : vector<8x8xf32>
    %179 = math.exp %178 : vector<8x8xf32>
    %cst_50 = arith.constant dense<0.000000e+00> : vector<8xf32>
    %180 = vector.multi_reduction <add>, %179, %cst_50 [1] : vector<8x8xf32> to vector<8xf32>
    %181 = vector.shape_cast %180 : vector<8xf32> to vector<8x1xf32>
    %182 = tpu.reciprocal %181 {approx = true} : vector<8x1xf32> -> vector<8x1xf32>
    %183 = vector.broadcast %182 : vector<8x1xf32> to vector<8x8xf32>
    %184 = arith.mulf %179, %183 : vector<8x8xf32>
    %c24_i32_51 = arith.constant 24 : i32
    %185 = vector.broadcast %c24_i32_51 : i32 to vector<1x128xi32>
    %186 = arith.cmpi sge, %19, %185 : vector<1x128xi32>
    %c32_i32 = arith.constant 32 : i32
    %187 = vector.broadcast %c32_i32 : i32 to vector<1x128xi32>
    %188 = arith.cmpi slt, %19, %187 : vector<1x128xi32>
    %189 = arith.andi %186, %188 : vector<1x128xi1>
    %cst_52 = arith.constant 0.000000e+00 : f32
    %190 = vector.shape_cast %189 : vector<1x128xi1> to vector<1x128xi1>
    %191 = vector.broadcast %190 : vector<1x128xi1> to vector<8x128xi1>
    %192 = vector.broadcast %cst_52 : f32 to vector<8x128xf32>
    %193 = arith.select %191, %5, %192 : vector<8x128xi1>, vector<8x128xf32>
    %194 = arith.truncf %193 : vector<8x128xf32> to vector<8x128xbf16>
    %195 = arith.truncf %184 : vector<8x8xf32> to vector<8x8xbf16>
    %cst_53 = arith.constant dense<0.000000e+00> : vector<8x128xf32>
    %196 = tpu.matmul %195, %194, %cst_53 {dimension_numbers = #tpu.dot_dimension_numbers<[1], [0], [0], [1], [0, 0, 1, 1], [], []>} : vector<8x8xbf16>, vector<8x128xbf16>, vector<8x128xf32> -> vector<8x128xf32>
    %197 = arith.addf %153, %196 : vector<8x128xf32>
    %198 = arith.truncf %197 : vector<8x128xf32> to vector<8x128xbf16>
    %c0_54 = arith.constant 0 : index
    %c0_55 = arith.constant 0 : index
    %199 = vector.load %arg2[%c0_54, %c0_55] : memref<128x128xbf16, #tpu.memory_space<vmem>>, vector<128x128xbf16>
    %cst_56 = arith.constant dense<0.000000e+00> : vector<8x128xf32>
    %200 = tpu.matmul %198, %199, %cst_56 {dimension_numbers = #tpu.dot_dimension_numbers<[1], [0], [0], [1], [0, 0, 1, 1], [], []>} : vector<8x128xbf16>, vector<128x128xbf16>, vector<8x128xf32> -> vector<8x128xf32>
    %c0_57 = arith.constant 0 : index
    %c0_58 = arith.constant 0 : index
    %201 = vector.load %arg5[%c0_57, %c0_58] : memref<8x128xf32, #tpu.memory_space<vmem>>, vector<8x128xf32>
    tpu.vector_store %arg5[%c0_57, %c0_58], %200 {strides = array<i32>} : memref<8x128xf32, #tpu.memory_space<vmem>>, vector<8x128xf32>,
    return
  }
}

</mosaic_0001>

<llo_original>
// kernel: tpu_custom_call.1
$region0: #{tpu_custom_call.1}
  #allocation0 [shape = 'u32[]', space=smem, size = 0x4, offset = 0x4, fixed_abs, tag = 'smem constant byte address 0x4 - core index']
  #allocation1 [shape = 'u32[144,128]{1,0:T(1,128)}', space=vmem, size = 0x12000, scoped, tag = 'internal scratch']
  %s0 = inlined_call_operand.hbm [shape: bf16[8,128], index: 0, kind: input, shape index: {}]
  %s1 = inlined_call_operand.hbm [shape: bf16[128,384], index: 1, kind: input, shape index: {}]
  %s2 = inlined_call_operand.hbm [shape: bf16[128,128], index: 2, kind: input, shape index: {}]
  %s3 = inlined_call_operand.vmem [shape: f32[8,128], index: 3, kind: input, shape index: {}]
  %s4 = inlined_call_operand.hbm [shape: f32[8,128], index: 4, kind: input, shape index: {}]
  %s5 = inlined_call_operand.hbm [shape: f32[8,128], index: 5, kind: output, shape index: {}]
  %s6 = sld [smem:[#allocation0]]
  $region46: #{tpu_custom_call.1} parent=0
    _
  %s8 = ssub.s32 1, %s6
  %s9 = scalar_select 0, %s8, %s6
  $region1: #{tpu_custom_call.1} parent=0
    #allocation2 [shape = 'u8[2048]{0}', space=vmem, size = 0x800, scoped, tag = 'input window, operand 0, single buffered']
    #allocation3 [shape = 's32[1]{0}', space=sflag, size = 0x4, scoped, tag = 'scoped memory for tpu_custom_call.1']
    #allocation4 [shape = 's32[1]{0}', space=sflag, size = 0x4, scoped, tag = 'scoped memory for tpu_custom_call.1']
    #allocation5 [shape = 'u8[98304]{0}', space=vmem, size = 0x18000, scoped, tag = 'input window, operand 1, single buffered']
    #allocation6 [shape = 's32[1]{0}', space=sflag, size = 0x4, scoped, tag = 'scoped memory for tpu_custom_call.1']
    #allocation7 [shape = 'u8[32768]{0}', space=vmem, size = 0x8000, scoped, tag = 'input window, operand 2, single buffered']
    #allocation8 [shape = 'u8[4096]{0}', space=vmem, size = 0x1000, scoped, tag = 'input window, operand 4, single buffered']
    #allocation9 [shape = 's32[1]{0}', space=sflag, size = 0x4, scoped, tag = 'scoped memory for tpu_custom_call.1']
    #allocation10 [shape = 'u8[4096]{0}', space=vmem, size = 0x1000, scoped, tag = 'output window, operand 0, single buffered']
    %10 = vsyncpa [#allocation3], 0
    %11 = vsyncpa [#allocation6], 0
    %12 = vsyncpa [#allocation9], 0
    %13 = vsyncpa [#allocation4], 0
    // Predicated region
    $region2: #{tpu_custom_call.1} parent=1 // pred_check
      _
    $region3: #{tpu_custom_call.1} parent=1 // pred_check_branch
      %15 = sbr.rel (0) target = $region5
    $region4: #{tpu_custom_call.1} parent=1 // pred_region
      %s17 = ssub.s32 64, 64
      %18 = vsyncadd [#allocation3], %s17
      %s20 = sshll.u32 [#allocation2], 4
      %s21 = int_to_ptr.vmem [resolvable:$true] %s20
      %23 = dma.hbm_to_vmem [thread:$0]  %s0, 64, %s21, [#allocation3]
    $region5: #{tpu_custom_call.1} parent=1 // pred_fallthru
      _
    // Predicated region
    $region6: #{tpu_custom_call.1} parent=1 // pred_check
      _
    $region7: #{tpu_custom_call.1} parent=1 // pred_check_branch
      %25 = sbr.rel (0) target = $region9
    $region8: #{tpu_custom_call.1} parent=1 // pred_region
      %s27 = ssub.s32 3072, 3072
      %28 = vsyncadd [#allocation6], %s27
      %s29 = sshll.u32 [#allocation5], 4
      %s30 = int_to_ptr.vmem [resolvable:$true] %s29
      %35 = dma.hbm_to_vmem [thread:$0]  %s1, 3072, %s30, [#allocation6], 192, 192, 12
    $region9: #{tpu_custom_call.1} parent=1 // pred_fallthru
      _
    // Predicated region
    $region10: #{tpu_custom_call.1} parent=1 // pred_check
      _
    $region11: #{tpu_custom_call.1} parent=1 // pred_check_branch
      %37 = sbr.rel (0) target = $region13
    $region12: #{tpu_custom_call.1} parent=1 // pred_region
      %s39 = ssub.s32 1024, 1024
      %40 = vsyncadd [#allocation6], %s39
      %s41 = sshll.u32 [#allocation7], 4
      %s42 = int_to_ptr.vmem [resolvable:$true] %s41
      %47 = dma.hbm_to_vmem [thread:$0]  %s2, 1024, %s42, [#allocation6], 64, 64, 4
    $region13: #{tpu_custom_call.1} parent=1 // pred_fallthru
      _
    // Predicated region
    $region14: #{tpu_custom_call.1} parent=1 // pred_check
      _
    $region15: #{tpu_custom_call.1} parent=1 // pred_check_branch
      %49 = sbr.rel (0) target = $region17
    $region16: #{tpu_custom_call.1} parent=1 // pred_region
      _
    $region17: #{tpu_custom_call.1} parent=1 // pred_fallthru
      _
    // Predicated region
    $region18: #{tpu_custom_call.1} parent=1 // pred_check
      _
    $region19: #{tpu_custom_call.1} parent=1 // pred_check_branch
      %51 = sbr.rel (0) target = $region21
    $region20: #{tpu_custom_call.1} parent=1 // pred_region
      %s53 = ssub.s32 128, 128
      %54 = vsyncadd [#allocation9], %s53
      %s56 = sshll.u32 [#allocation8], 4
      %s57 = int_to_ptr.vmem [resolvable:$true] %s56
      %59 = dma.hbm_to_vmem [thread:$0]  %s4, 128, %s57, [#allocation9]
    $region21: #{tpu_custom_call.1} parent=1 // pred_fallthru
      _
    // Predicated region
    $region22: #{tpu_custom_call.1} parent=1 // pred_check
      _
    $region23: #{tpu_custom_call.1} parent=1 // pred_check_branch
      %61 = sbr.rel (0) target = $region25
    $region24: #{tpu_custom_call.1} parent=1 // pred_region
      %62 = dma.done [#allocation3], 64
    $region25: #{tpu_custom_call.1} parent=1 // pred_fallthru
      _
    // Predicated region
    $region26: #{tpu_custom_call.1} parent=1 // pred_check
      _
    $region27: #{tpu_custom_call.1} parent=1 // pred_check_branch
      %64 = sbr.rel (0) target = $region29
    $region28: #{tpu_custom_call.1} parent=1 // pred_region
      %65 = dma.done [#allocation6], 3072
    $region29: #{tpu_custom_call.1} parent=1 // pred_fallthru
      _
    // Predicated region
    $region30: #{tpu_custom_call.1} parent=1 // pred_check
      _
    $region31: #{tpu_custom_call.1} parent=1 // pred_check_branch
      %67 = sbr.rel (0) target = $region33
    $region32: #{tpu_custom_call.1} parent=1 // pred_region
      %68 = dma.done [#allocation6], 1024
    $region33: #{tpu_custom_call.1} parent=1 // pred_fallthru
      _
    // Predicated region
    $region34: #{tpu_custom_call.1} parent=1 // pred_check
      _
    $region35: #{tpu_custom_call.1} parent=1 // pred_check_branch
      %70 = sbr.rel (0) target = $region37
    $region36: #{tpu_custom_call.1} parent=1 // pred_region
      %71 = dma.done [#allocation9], 128
    $region37: #{tpu_custom_call.1} parent=1 // pred_fallthru
      _
    %v73 = vld [vmem:[#allocation2] sm:$0xf]
    %v74 = vld [vmem:[#allocation5] sm:$0xff]
    %v75 = vld [vmem:[#allocation5 + $0x8] sm:$0xf]
    %v76 = vld [vmem:[#allocation5 + $0xc] sm:$0xff]
    %v77 = vld [vmem:[#allocation5 + $0x14] sm:$0xf]
    %v78 = vld [vmem:[#allocation5 + $0x18] sm:$0xff]
    %v79 = vld [vmem:[#allocation5 + $0x20] sm:$0xf]
    %v80 = vld [vmem:[#allocation5 + $0x24] sm:$0xff]
    %v81 = vld [vmem:[#allocation5 + $0x2c] sm:$0xf]
    %v82 = vld [vmem:[#allocation5 + $0x30] sm:$0xff]
    %v83 = vld [vmem:[#allocation5 + $0x38] sm:$0xf]
    %v84 = vld [vmem:[#allocation5 + $0x3c] sm:$0xff]
    %v85 = vld [vmem:[#allocation5 + $0x44] sm:$0xf]
    %v86 = vld [vmem:[#allocation5 + $0x48] sm:$0xff]
    %v87 = vld [vmem:[#allocation5 + $0x50] sm:$0xf]
    %v88 = vld [vmem:[#allocation5 + $0x54] sm:$0xff]
    %v89 = vld [vmem:[#allocation5 + $0x5c] sm:$0xf]
    %v90 = vld [vmem:[#allocation5 + $0x60] sm:$0xff]
    %v91 = vld [vmem:[#allocation5 + $0x68] sm:$0xf]
    %v92 = vld [vmem:[#allocation5 + $0x6c] sm:$0xff]
    %v93 = vld [vmem:[#allocation5 + $0x74] sm:$0xf]
    %v94 = vld [vmem:[#allocation5 + $0x78] sm:$0xff]
    %v95 = vld [vmem:[#allocation5 + $0x80] sm:$0xf]
    %v96 = vld [vmem:[#allocation5 + $0x84] sm:$0xff]
    %v97 = vld [vmem:[#allocation5 + $0x8c] sm:$0xf]
    %v98 = vld [vmem:[#allocation5 + $0x90] sm:$0xff]
    %v99 = vld [vmem:[#allocation5 + $0x98] sm:$0xf]
    %v100 = vld [vmem:[#allocation5 + $0x9c] sm:$0xff]
    %v101 = vld [vmem:[#allocation5 + $0xa4] sm:$0xf]
    %v102 = vld [vmem:[#allocation5 + $0xa8] sm:$0xff]
    %v103 = vld [vmem:[#allocation5 + $0xb0] sm:$0xf]
    %v104 = vld [vmem:[#allocation5 + $0xb4] sm:$0xff]
    %v105 = vld [vmem:[#allocation5 + $0xbc] sm:$0xf]
    %v138 = vunpack.c.l.b16 %v74
    %v139 = vunpack.c.h.b16 %v74
    %v140 = vunpack.c.l.b16 %v75
    %v141 = vunpack.c.l.b16 %v76
    %v142 = vunpack.c.h.b16 %v76
    %v143 = vunpack.c.l.b16 %v77
    %v144 = vunpack.c.l.b16 %v78
    %v145 = vunpack.c.h.b16 %v78
    %v146 = vunpack.c.l.b16 %v79
    %v147 = vunpack.c.l.b16 %v80
    %v148 = vunpack.c.h.b16 %v80
    %v149 = vunpack.c.l.b16 %v81
    %v150 = vunpack.c.l.b16 %v82
    %v151 = vunpack.c.h.b16 %v82
    %v152 = vunpack.c.l.b16 %v83
    %v153 = vunpack.c.l.b16 %v84
    %v154 = vunpack.c.h.b16 %v84
    %v155 = vunpack.c.l.b16 %v85
    %v156 = vunpack.c.l.b16 %v86
    %v157 = vunpack.c.h.b16 %v86
    %v158 = vunpack.c.l.b16 %v87
    %v159 = vunpack.c.l.b16 %v88
    %v160 = vunpack.c.h.b16 %v88
    %v161 = vunpack.c.l.b16 %v89
    %v162 = vunpack.c.l.b16 %v90
    %v163 = vunpack.c.h.b16 %v90
    %v164 = vunpack.c.l.b16 %v91
    %v165 = vunpack.c.l.b16 %v92
    %v166 = vunpack.c.h.b16 %v92
    %v167 = vunpack.c.l.b16 %v93
    %v168 = vunpack.c.l.b16 %v94
    %v169 = vunpack.c.h.b16 %v94
    %v170 = vunpack.c.l.b16 %v95
    %v171 = vunpack.c.l.b16 %v96
    %v172 = vunpack.c.h.b16 %v96
    %v173 = vunpack.c.l.b16 %v97
    %v174 = vunpack.c.l.b16 %v98
    %v175 = vunpack.c.h.b16 %v98
    %v176 = vunpack.c.l.b16 %v99
    %v177 = vunpack.c.l.b16 %v100
    %v178 = vunpack.c.h.b16 %v100
    %v179 = vunpack.c.l.b16 %v101
    %v180 = vunpack.c.l.b16 %v102
    %v181 = vunpack.c.h.b16 %v102
    %v182 = vunpack.c.l.b16 %v103
    %v183 = vunpack.c.l.b16 %v104
    %v184 = vunpack.c.h.b16 %v104
    %v185 = vunpack.c.l.b16 %v105
    %v186 = vpack.c.b16 %v141, %v138
    %v187 = vpack.c.b16 %v142, %v139
    %v188 = vpack.c.b16 %v143, %v140
    %v189 = vpack.c.b16 %v147, %v144
    %v190 = vpack.c.b16 %v148, %v145
    %v191 = vpack.c.b16 %v149, %v146
    %v192 = vpack.c.b16 %v153, %v150
    %v193 = vpack.c.b16 %v154, %v151
    %v194 = vpack.c.b16 %v155, %v152
    %v195 = vpack.c.b16 %v159, %v156
    %v196 = vpack.c.b16 %v160, %v157
    %v197 = vpack.c.b16 %v161, %v158
    %v198 = vpack.c.b16 %v165, %v162
    %v199 = vpack.c.b16 %v166, %v163
    %v200 = vpack.c.b16 %v167, %v164
    %v201 = vpack.c.b16 %v171, %v168
    %v202 = vpack.c.b16 %v172, %v169
    %v203 = vpack.c.b16 %v173, %v170
    %v204 = vpack.c.b16 %v177, %v174
    %v205 = vpack.c.b16 %v178, %v175
    %v206 = vpack.c.b16 %v179, %v176
    %v207 = vpack.c.b16 %v183, %v180
    %v208 = vpack.c.b16 %v184, %v181
    %v209 = vpack.c.b16 %v185, %v182
    %234 = vmatprep.subr.bf16.mxu0 %v187
    %235 = vmatpush1.bf16.msra.mxu0 %v186
    %236 = vmatprep.subr.bf16.mxu0 %v190
    %237 = vmatpush1.bf16.msra.mxu0 %v189
    %238 = vmatprep.subr.bf16.mxu0 %v193
    %239 = vmatpush1.bf16.msra.mxu0 %v192
    %240 = vmatprep.subr.bf16.mxu0 %v196
    %241 = vmatpush1.bf16.msra.mxu0 %v195
    %242 = vmatprep.subr.bf16.mxu0 %v199
    %243 = vmatpush1.bf16.msra.mxu0 %v198
    %244 = vmatprep.subr.bf16.mxu0 %v202
    %245 = vmatpush1.bf16.msra.mxu0 %v201
    %246 = vmatprep.subr.bf16.mxu0 %v205
    %247 = vmatpush1.bf16.msra.mxu0 %v204
    %248 = vmatprep.subr.bf16.mxu0 %v208
    %249 = vmatpush1.bf16.msra.mxu0 %v207
    %250 = vmatprep.subr.bf16.mxu0 0
    %251 = vmatpush1.bf16.msra.mxu0 0
    %252 = vmatprep.subr.bf16.mxu0 0
    %253 = vmatpush1.bf16.msra.mxu0 0
    %254 = vmatprep.subr.bf16.mxu0 0
    %255 = vmatpush1.bf16.msra.mxu0 0
    %256 = vmatprep.subr.bf16.mxu0 0
    %257 = vmatpush1.bf16.msra.mxu0 0
    %258 = vmatprep.subr.bf16.mxu0 0
    %259 = vmatpush1.bf16.msra.mxu0 0
    %260 = vmatprep.subr.bf16.mxu0 0
    %261 = vmatpush1.bf16.msra.mxu0 0
    %262 = vmatprep.subr.bf16.mxu0 0
    %263 = vmatpush1.bf16.msra.mxu0 0
    %264 = vmatprep.subr.bf16.mxu0 0
    %265 = vmatpush1.bf16.msra.mxu0 0
    %266 = vmatprep.mubr.bf16.mxu0 0
    %267 = vmatmul.mubr.bf16.gmra.mrb[0].mxu0 %v73
    %v268 = vpop.f32.mrb[0].mxu0
    %v269 = vadd.f32 0.0, %v268
    %v270 = vpop.f32.mrb[0].mxu0
    %v271 = vadd.f32 0.0, %v270
    %v272 = vpop.f32.mrb[0].mxu0
    %v273 = vpop.f32.mrb[0].mxu0
    %274 = vdwg.mxu0
    %275 = vmatprep.subr.bf16.mxu0 0
    %276 = vmatpush1.bf16.msra.mxu0 %v188
    %277 = vmatprep.subr.bf16.mxu0 0
    %278 = vmatpush1.bf16.msra.mxu0 %v191
    %279 = vmatprep.subr.bf16.mxu0 0
    %280 = vmatpush1.bf16.msra.mxu0 %v194
    %281 = vmatprep.subr.bf16.mxu0 0
    %282 = vmatpush1.bf16.msra.mxu0 %v197
    %283 = vmatprep.subr.bf16.mxu0 0
    %284 = vmatpush1.bf16.msra.mxu0 %v200
    %285 = vmatprep.subr.bf16.mxu0 0
    %286 = vmatpush1.bf16.msra.mxu0 %v203
    %287 = vmatprep.subr.bf16.mxu0 0
    %288 = vmatpush1.bf16.msra.mxu0 %v206
    %289 = vmatprep.subr.bf16.mxu0 0
    %290 = vmatpush1.bf16.msra.mxu0 %v209
    %291 = vmatprep.subr.bf16.mxu0 0
    %292 = vmatpush1.bf16.msra.mxu0 0
    %293 = vmatprep.subr.bf16.mxu0 0
    %294 = vmatpush1.bf16.msra.mxu0 0
    %295 = vmatprep.subr.bf16.mxu0 0
    %296 = vmatpush1.bf16.msra.mxu0 0
    %297 = vmatprep.subr.bf16.mxu0 0
    %298 = vmatpush1.bf16.msra.mxu0 0
    %299 = vmatprep.subr.bf16.mxu0 0
    %300 = vmatpush1.bf16.msra.mxu0 0
    %301 = vmatprep.subr.bf16.mxu0 0
    %302 = vmatpush1.bf16.msra.mxu0 0
    %303 = vmatprep.subr.bf16.mxu0 0
    %304 = vmatpush1.bf16.msra.mxu0 0
    %305 = vmatprep.subr.bf16.mxu0 0
    %306 = vmatpush1.bf16.msra.mxu0 0
    %307 = vmatprep.mubr.bf16.mxu0 0
    %308 = vmatmul.mubr.bf16.gmra.mrb[0].mxu0 %v73
    %v309 = vpop.f32.mrb[0].mxu0
    %v310 = vadd.f32 0.0, %v309
    %v311 = vpop.f32.mrb[0].mxu0
    %v312 = vpop.f32.mrb[0].mxu0
    %v313 = vpop.f32.mrb[0].mxu0
    %314 = vdwg.mxu0
    %v315 = vld [vmem:[%s3] sm:$0xff]
    %v316 = vld [vmem:[#allocation8] sm:$0xff]
    %v317 = vmul.f32 %v269, %v315
    %318 = vrot.lane.b32.xlu0 %v269, 64
    %v319 = vpop.permute.xlu0 %318
    %v320 = vmul.f32 %v319, %v316
    %v321 = vadd.f32 %v317, %v320
    %v322 = vmul.f32 %v271, %v315
    %323 = vrot.lane.b32.xlu0 %v271, 64
    %v324 = vpop.permute.xlu0 %323
    %v325 = vmul.f32 %v324, %v316
    %v326 = vadd.f32 %v322, %v325
    %v327 = vlaneseq
    %v328 = vshrl.u32 %v327, 7
    %v329 = vlaneseq
    %v330 = vand.u32 %v329, 127
    %vm331 = vcmp.ge.s32.totalorder %v328, %v330
    %v332 = vpack.c.bf16 %v321, %v321
    %vm333 = vcmp.ge.s32.totalorder %v330, 0
    %vm334 = vcmp.lt.s32.totalorder %v330, 4
    %vm335 = vmand %vm333, %vm334
    %vm336 = vcmp.ge.s32.totalorder %v330, 64
    %vm337 = vcmp.lt.s32.totalorder %v330, 68
    %vm338 = vmand %vm336, %vm337
    %vm339 = vmor %vm335, %vm338
    %v340 = vsel %vm339, 1, 0
    %vm341 = vcmp.eq.s32.totalorder %v340, 1
    %v342 = vsel %vm341, %v326, 0.0
    %v343 = vpack.c.bf16 %v342, %v342
    %344 = vmatprep.subr.bf16.mxu0 0
    %345 = vmatpush1.bf16.xpose.msra.mxu0 %v343
    %346 = vmatprep.subr.bf16.mxu0 0
    %347 = vmatpush1.bf16.xpose.msra.mxu0 0
    %348 = vmatprep.subr.bf16.mxu0 0
    %349 = vmatpush1.bf16.xpose.msra.mxu0 0
    %350 = vmatprep.subr.bf16.mxu0 0
    %351 = vmatpush1.bf16.xpose.msra.mxu0 0
    %352 = vmatprep.subr.bf16.mxu0 0
    %353 = vmatpush1.bf16.xpose.msra.mxu0 0
    %354 = vmatprep.subr.bf16.mxu0 0
    %355 = vmatpush1.bf16.xpose.msra.mxu0 0
    %356 = vmatprep.subr.bf16.mxu0 0
    %357 = vmatpush1.bf16.xpose.msra.mxu0 0
    %358 = vmatprep.subr.bf16.mxu0 0
    %359 = vmatpush1.bf16.xpose.msra.mxu0 0
    %360 = vmatprep.subr.bf16.mxu0 0
    %361 = vmatpush1.bf16.xpose.msra.mxu0 0
    %362 = vmatprep.subr.bf16.mxu0 0
    %363 = vmatpush1.bf16.xpose.msra.mxu0 0
    %364 = vmatprep.subr.bf16.mxu0 0
    %365 = vmatpush1.bf16.xpose.msra.mxu0 0
    %366 = vmatprep.subr.bf16.mxu0 0
    %367 = vmatpush1.bf16.xpose.msra.mxu0 0
    %368 = vmatprep.subr.bf16.mxu0 0
    %369 = vmatpush1.bf16.xpose.msra.mxu0 0
    %370 = vmatprep.subr.bf16.mxu0 0
    %371 = vmatpush1.bf16.xpose.msra.mxu0 0
    %372 = vmatprep.subr.bf16.mxu0 0
    %373 = vmatpush1.bf16.xpose.msra.mxu0 0
    %374 = vmatprep.subr.bf16.mxu0 0
    %375 = vmatpush1.bf16.xpose.msra.mxu0 0
    %376 = vmatprep.mubr.bf16.mxu0 0
    %377 = vmatmul.mubr.bf16.gmra.mrb[0].mxu0 %v332
    %v378 = vpop.f32.mrb[0].mxu0
    %v379 = vadd.f32 0.0, %v378
    %v380 = vpop.f32.mrb[0].mxu0
    %v381 = vpop.f32.mrb[0].mxu0
    %v382 = vpop.f32.mrb[0].mxu0
    %383 = vdwg.mxu0
    %v384 = vmul.f32 %v379, 0.35355338
    %v385 = vsel %vm331, %v384, -1e+30
    %vm386 = vcmask 64512
    %v387 = vsel %vm386, %v385, -inf
    %388 = vmax.xlane.f32.xlu0 %v387
    %v389 = vpop.xlane.xlu0 %388
    %v390 = vsub.f32 %v385, %v389
    %v391 = vmul.f32 %v390, 1.442695
    %v392 = vpow.pop %v391
    %v393 = vsel %vm386, %v392, 0.0
    %394 = vadd.xlane.f32.xlu0 %v393
    %v395 = vpop.xlane.xlu0 %394
    %v396 = vrcp.pop %v395
    %v397 = vmul.f32 %v392, %v396
    %vm398 = vcmp.lt.s32.totalorder %v330, 8
    %vm399 = vmand %vm333, %vm398
    %v400 = vsel %vm399, 1, 0
    %vm401 = vcmp.eq.s32.totalorder %v400, 1
    %v402 = vsel %vm401, %v310, 0.0
    %v403 = vpack.c.bf16 %v402, %v402
    %v404 = vpack.c.bf16 %v397, %v397
    %vm405 = vcmp.ge.s32.totalorder %v330, 4
    %vm406 = vmand %vm405, %vm398
    %vm407 = vcmp.ge.s32.totalorder %v330, 68
    %vm408 = vcmp.lt.s32.totalorder %v330, 72
    %vm409 = vmand %vm407, %vm408
    %vm410 = vmor %vm406, %vm409
    %v411 = vsel %vm410, 1, 0
    %vm412 = vcmp.eq.s32.totalorder %v411, 1
    %v413 = vsel %vm412, %v326, 0.0
    %v414 = vpack.c.bf16 %v413, %v413
    %415 = vmatprep.subr.bf16.mxu0 0
    %416 = vmatpush1.bf16.xpose.msra.mxu0 %v414
    %417 = vmatprep.subr.bf16.mxu0 0
    %418 = vmatpush1.bf16.xpose.msra.mxu0 0
    %419 = vmatprep.subr.bf16.mxu0 0
    %420 = vmatpush1.bf16.xpose.msra.mxu0 0
    %421 = vmatprep.subr.bf16.mxu0 0
    %422 = vmatpush1.bf16.xpose.msra.mxu0 0
    %423 = vmatprep.subr.bf16.mxu0 0
    %424 = vmatpush1.bf16.xpose.msra.mxu0 0
    %425 = vmatprep.subr.bf16.mxu0 0
    %426 = vmatpush1.bf16.xpose.msra.mxu0 0
    %427 = vmatprep.subr.bf16.mxu0 0
    %428 = vmatpush1.bf16.xpose.msra.mxu0 0
    %429 = vmatprep.subr.bf16.mxu0 0
    %430 = vmatpush1.bf16.xpose.msra.mxu0 0
    %431 = vmatprep.subr.bf16.mxu0 0
    %432 = vmatpush1.bf16.xpose.msra.mxu0 0
    %433 = vmatprep.subr.bf16.mxu0 0
    %434 = vmatpush1.bf16.xpose.msra.mxu0 0
    %435 = vmatprep.subr.bf16.mxu0 0
    %436 = vmatpush1.bf16.xpose.msra.mxu0 0
    %437 = vmatprep.subr.bf16.mxu0 0
    %438 = vmatpush1.bf16.xpose.msra.mxu0 0
    %439 = vmatprep.subr.bf16.mxu0 0
    %440 = vmatpush1.bf16.xpose.msra.mxu0 0
    %441 = vmatprep.subr.bf16.mxu0 0
    %442 = vmatpush1.bf16.xpose.msra.mxu0 0
    %443 = vmatprep.subr.bf16.mxu0 0
    %444 = vmatpush1.bf16.xpose.msra.mxu0 0
    %445 = vmatprep.subr.bf16.mxu0 0
    %446 = vmatpush1.bf16.xpose.msra.mxu0 0
    %447 = vmatprep.mubr.bf16.mxu0 0
    %448 = vmatmul.mubr.bf16.gmra.mrb[0].mxu0 %v332
    %v449 = vpop.f32.mrb[0].mxu0
    %v450 = vadd.f32 0.0, %v449
    %v451 = vpop.f32.mrb[0].mxu0
    %v452 = vpop.f32.mrb[0].mxu0
    %v453 = vpop.f32.mrb[0].mxu0
    %454 = vdwg.mxu0
    %v455 = vmul.f32 %v450, 0.35355338
    %v456 = vsel %vm331, %v455, -1e+30
    %v457 = vsel %vm386, %v456, -inf
    %458 = vmax.xlane.f32.xlu0 %v457
    %v459 = vpop.xlane.xlu0 %458
    %v460 = vsub.f32 %v456, %v459
    %v461 = vmul.f32 %v460, 1.442695
    %v462 = vpow.pop %v461
    %v463 = vsel %vm386, %v462, 0.0
    %464 = vadd.xlane.f32.xlu0 %v463
    %v465 = vpop.xlane.xlu0 %464
    %v466 = vrcp.pop %v465
    %v467 = vmul.f32 %v462, %v466
    %vm468 = vcmp.ge.s32.totalorder %v330, 8
    %vm469 = vcmp.lt.s32.totalorder %v330, 16
    %vm470 = vmand %vm468, %vm469
    %v471 = vsel %vm470, 1, 0
    %vm472 = vcmp.eq.s32.totalorder %v471, 1
    %v473 = vsel %vm472, %v310, 0.0
    %v474 = vpack.c.bf16 %v473, %v473
    %v475 = vpack.c.bf16 %v467, %v467
    %v477 = vsel %vm386, %v475, 0
    %vm479 = vcmask 1043456
    %v481 = vsel %vm479, %v474, 0
    %483 = vmatprep.subr.bf16.mxu0 0
    %484 = vmatpush1.bf16.msra.mxu0 %v481
    %485 = vmatprep.subr.bf16.mxu0 0
    %486 = vmatpush1.bf16.msra.mxu0 0
    %487 = vmatprep.subr.bf16.mxu0 0
    %488 = vmatpush1.bf16.msra.mxu0 0
    %489 = vmatprep.subr.bf16.mxu0 0
    %490 = vmatpush1.bf16.msra.mxu0 0
    %491 = vmatprep.subr.bf16.mxu0 0
    %492 = vmatpush1.bf16.msra.mxu0 0
    %493 = vmatprep.subr.bf16.mxu0 0
    %494 = vmatpush1.bf16.msra.mxu0 0
    %495 = vmatprep.subr.bf16.mxu0 0
    %496 = vmatpush1.bf16.msra.mxu0 0
    %497 = vmatprep.subr.bf16.mxu0 0
    %498 = vmatpush1.bf16.msra.mxu0 0
    %499 = vmatprep.subr.bf16.mxu0 0
    %500 = vmatpush1.bf16.msra.mxu0 0
    %501 = vmatprep.subr.bf16.mxu0 0
    %502 = vmatpush1.bf16.msra.mxu0 0
    %503 = vmatprep.subr.bf16.mxu0 0
    %504 = vmatpush1.bf16.msra.mxu0 0
    %505 = vmatprep.subr.bf16.mxu0 0
    %506 = vmatpush1.bf16.msra.mxu0 0
    %507 = vmatprep.subr.bf16.mxu0 0
    %508 = vmatpush1.bf16.msra.mxu0 0
    %509 = vmatprep.subr.bf16.mxu0 0
    %510 = vmatpush1.bf16.msra.mxu0 0
    %511 = vmatprep.subr.bf16.mxu0 0
    %512 = vmatpush1.bf16.msra.mxu0 0
    %513 = vmatprep.subr.bf16.mxu0 0
    %514 = vmatpush1.bf16.msra.mxu0 0
    %515 = vmatprep.mubr.bf16.mxu0 0
    %516 = vmatmul.mubr.bf16.gmra.mrb[0].mxu0 %v477
    %v517 = vpop.f32.mrb[0].mxu0
    %v518 = vadd.f32 0.0, %v517
    %v519 = vpop.f32.mrb[0].mxu0
    %v520 = vpop.f32.mrb[0].mxu0
    %v521 = vpop.f32.mrb[0].mxu0
    %522 = vdwg.mxu0
    %v524 = vsel %vm386, %v404, 0
    %v527 = vsel %vm479, %v403, 0
    %529 = vmatprep.subr.bf16.mxu0 0
    %530 = vmatpush1.bf16.msra.mxu0 %v527
    %531 = vmatprep.subr.bf16.mxu0 0
    %532 = vmatpush1.bf16.msra.mxu0 0
    %533 = vmatprep.subr.bf16.mxu0 0
    %534 = vmatpush1.bf16.msra.mxu0 0
    %535 = vmatprep.subr.bf16.mxu0 0
    %536 = vmatpush1.bf16.msra.mxu0 0
    %537 = vmatprep.subr.bf16.mxu0 0
    %538 = vmatpush1.bf16.msra.mxu0 0
    %539 = vmatprep.subr.bf16.mxu0 0
    %540 = vmatpush1.bf16.msra.mxu0 0
    %541 = vmatprep.subr.bf16.mxu0 0
    %542 = vmatpush1.bf16.msra.mxu0 0
    %543 = vmatprep.subr.bf16.mxu0 0
    %544 = vmatpush1.bf16.msra.mxu0 0
    %545 = vmatprep.subr.bf16.mxu0 0
    %546 = vmatpush1.bf16.msra.mxu0 0
    %547 = vmatprep.subr.bf16.mxu0 0
    %548 = vmatpush1.bf16.msra.mxu0 0
    %549 = vmatprep.subr.bf16.mxu0 0
    %550 = vmatpush1.bf16.msra.mxu0 0
    %551 = vmatprep.subr.bf16.mxu0 0
    %552 = vmatpush1.bf16.msra.mxu0 0
    %553 = vmatprep.subr.bf16.mxu0 0
    %554 = vmatpush1.bf16.msra.mxu0 0
    %555 = vmatprep.subr.bf16.mxu0 0
    %556 = vmatpush1.bf16.msra.mxu0 0
    %557 = vmatprep.subr.bf16.mxu0 0
    %558 = vmatpush1.bf16.msra.mxu0 0
    %559 = vmatprep.subr.bf16.mxu0 0
    %560 = vmatpush1.bf16.msra.mxu0 0
    %561 = vmatprep.mubr.bf16.mxu0 0
    %562 = vmatmul.mubr.bf16.gmra.mrb[0].mxu0 %v524
    %v563 = vpop.f32.mrb[0].mxu0
    %v564 = vadd.f32 %v518, %v563
    %v565 = vpop.f32.mrb[0].mxu0
    %v566 = vpop.f32.mrb[0].mxu0
    %v567 = vpop.f32.mrb[0].mxu0
    %568 = vdwg.mxu0
    %vm569 = vcmp.lt.s32.totalorder %v330, 12
    %vm570 = vmand %vm468, %vm569
    %vm571 = vcmp.ge.s32.totalorder %v330, 72
    %vm572 = vcmp.lt.s32.totalorder %v330, 76
    %vm573 = vmand %vm571, %vm572
    %vm574 = vmor %vm570, %vm573
    %v575 = vsel %vm574, 1, 0
    %vm576 = vcmp.eq.s32.totalorder %v575, 1
    %v577 = vsel %vm576, %v326, 0.0
    %v578 = vpack.c.bf16 %v577, %v577
    %579 = vmatprep.subr.bf16.mxu0 0
    %580 = vmatpush1.bf16.xpose.msra.mxu0 %v578
    %581 = vmatprep.subr.bf16.mxu0 0
    %582 = vmatpush1.bf16.xpose.msra.mxu0 0
    %583 = vmatprep.subr.bf16.mxu0 0
    %584 = vmatpush1.bf16.xpose.msra.mxu0 0
    %585 = vmatprep.subr.bf16.mxu0 0
    %586 = vmatpush1.bf16.xpose.msra.mxu0 0
    %587 = vmatprep.subr.bf16.mxu0 0
    %588 = vmatpush1.bf16.xpose.msra.mxu0 0
    %589 = vmatprep.subr.bf16.mxu0 0
    %590 = vmatpush1.bf16.xpose.msra.mxu0 0
    %591 = vmatprep.subr.bf16.mxu0 0
    %592 = vmatpush1.bf16.xpose.msra.mxu0 0
    %593 = vmatprep.subr.bf16.mxu0 0
    %594 = vmatpush1.bf16.xpose.msra.mxu0 0
    %595 = vmatprep.subr.bf16.mxu0 0
    %596 = vmatpush1.bf16.xpose.msra.mxu0 0
    %597 = vmatprep.subr.bf16.mxu0 0
    %598 = vmatpush1.bf16.xpose.msra.mxu0 0
    %599 = vmatprep.subr.bf16.mxu0 0
    %600 = vmatpush1.bf16.xpose.msra.mxu0 0
    %601 = vmatprep.subr.bf16.mxu0 0
    %602 = vmatpush1.bf16.xpose.msra.mxu0 0
    %603 = vmatprep.subr.bf16.mxu0 0
    %604 = vmatpush1.bf16.xpose.msra.mxu0 0
    %605 = vmatprep.subr.bf16.mxu0 0
    %606 = vmatpush1.bf16.xpose.msra.mxu0 0
    %607 = vmatprep.subr.bf16.mxu0 0
    %608 = vmatpush1.bf16.xpose.msra.mxu0 0
    %609 = vmatprep.subr.bf16.mxu0 0
    %610 = vmatpush1.bf16.xpose.msra.mxu0 0
    %611 = vmatprep.mubr.bf16.mxu0 0
    %612 = vmatmul.mubr.bf16.gmra.mrb[0].mxu0 %v332
    %v613 = vpop.f32.mrb[0].mxu0
    %v614 = vadd.f32 0.0, %v613
    %v615 = vpop.f32.mrb[0].mxu0
    %v616 = vpop.f32.mrb[0].mxu0
    %v617 = vpop.f32.mrb[0].mxu0
    %618 = vdwg.mxu0
    %v619 = vmul.f32 %v614, 0.35355338
    %v620 = vsel %vm331, %v619, -1e+30
    %v621 = vsel %vm386, %v620, -inf
    %622 = vmax.xlane.f32.xlu0 %v621
    %v623 = vpop.xlane.xlu0 %622
    %v624 = vsub.f32 %v620, %v623
    %v625 = vmul.f32 %v624, 1.442695
    %v626 = vpow.pop %v625
    %v627 = vsel %vm386, %v626, 0.0
    %628 = vadd.xlane.f32.xlu0 %v627
    %v629 = vpop.xlane.xlu0 %628
    %v630 = vrcp.pop %v629
    %v631 = vmul.f32 %v626, %v630
    %vm632 = vcmp.ge.s32.totalorder %v330, 16
    %vm633 = vcmp.lt.s32.totalorder %v330, 24
    %vm634 = vmand %vm632, %vm633
    %v635 = vsel %vm634, 1, 0
    %vm636 = vcmp.eq.s32.totalorder %v635, 1
    %v637 = vsel %vm636, %v310, 0.0
    %v638 = vpack.c.bf16 %v637, %v637
    %v639 = vpack.c.bf16 %v631, %v631
    %v641 = vsel %vm386, %v639, 0
    %v644 = vsel %vm479, %v638, 0
    %646 = vmatprep.subr.bf16.mxu0 0
    %647 = vmatpush1.bf16.msra.mxu0 %v644
    %648 = vmatprep.subr.bf16.mxu0 0
    %649 = vmatpush1.bf16.msra.mxu0 0
    %650 = vmatprep.subr.bf16.mxu0 0
    %651 = vmatpush1.bf16.msra.mxu0 0
    %652 = vmatprep.subr.bf16.mxu0 0
    %653 = vmatpush1.bf16.msra.mxu0 0
    %654 = vmatprep.subr.bf16.mxu0 0
    %655 = vmatpush1.bf16.msra.mxu0 0
    %656 = vmatprep.subr.bf16.mxu0 0
    %657 = vmatpush1.bf16.msra.mxu0 0
    %658 = vmatprep.subr.bf16.mxu0 0
    %659 = vmatpush1.bf16.msra.mxu0 0
    %660 = vmatprep.subr.bf16.mxu0 0
    %661 = vmatpush1.bf16.msra.mxu0 0
    %662 = vmatprep.subr.bf16.mxu0 0
    %663 = vmatpush1.bf16.msra.mxu0 0
    %664 = vmatprep.subr.bf16.mxu0 0
    %665 = vmatpush1.bf16.msra.mxu0 0
    %666 = vmatprep.subr.bf16.mxu0 0
    %667 = vmatpush1.bf16.msra.mxu0 0
    %668 = vmatprep.subr.bf16.mxu0 0
    %669 = vmatpush1.bf16.msra.mxu0 0
    %670 = vmatprep.subr.bf16.mxu0 0
    %671 = vmatpush1.bf16.msra.mxu0 0
    %672 = vmatprep.subr.bf16.mxu0 0
    %673 = vmatpush1.bf16.msra.mxu0 0
    %674 = vmatprep.subr.bf16.mxu0 0
    %675 = vmatpush1.bf16.msra.mxu0 0
    %676 = vmatprep.subr.bf16.mxu0 0
    %677 = vmatpush1.bf16.msra.mxu0 0
    %678 = vmatprep.mubr.bf16.mxu0 0
    %679 = vmatmul.mubr.bf16.gmra.mrb[0].mxu0 %v641
    %v680 = vpop.f32.mrb[0].mxu0
    %v681 = vadd.f32 0.0, %v680
    %v682 = vpop.f32.mrb[0].mxu0
    %v683 = vpop.f32.mrb[0].mxu0
    %v684 = vpop.f32.mrb[0].mxu0
    %685 = vdwg.mxu0
    %v686 = vadd.f32 %v564, %v681
    %vm687 = vcmp.ge.s32.totalorder %v330, 12
    %vm688 = vmand %vm687, %vm469
    %vm689 = vcmp.ge.s32.totalorder %v330, 76
    %vm690 = vcmp.lt.s32.totalorder %v330, 80
    %vm691 = vmand %vm689, %vm690
    %vm692 = vmor %vm688, %vm691
    %v693 = vsel %vm692, 1, 0
    %vm694 = vcmp.eq.s32.totalorder %v693, 1
    %v695 = vsel %vm694, %v326, 0.0
    %v696 = vpack.c.bf16 %v695, %v695
    %697 = vmatprep.subr.bf16.mxu0 0
    %698 = vmatpush1.bf16.xpose.msra.mxu0 %v696
    %699 = vmatprep.subr.bf16.mxu0 0
    %700 = vmatpush1.bf16.xpose.msra.mxu0 0
    %701 = vmatprep.subr.bf16.mxu0 0
    %702 = vmatpush1.bf16.xpose.msra.mxu0 0
    %703 = vmatprep.subr.bf16.mxu0 0
    %704 = vmatpush1.bf16.xpose.msra.mxu0 0
    %705 = vmatprep.subr.bf16.mxu0 0
    %706 = vmatpush1.bf16.xpose.msra.mxu0 0
    %707 = vmatprep.subr.bf16.mxu0 0
    %708 = vmatpush1.bf16.xpose.msra.mxu0 0
    %709 = vmatprep.subr.bf16.mxu0 0
    %710 = vmatpush1.bf16.xpose.msra.mxu0 0
    %711 = vmatprep.subr.bf16.mxu0 0
    %712 = vmatpush1.bf16.xpose.msra.mxu0 0
    %713 = vmatprep.subr.bf16.mxu0 0
    %714 = vmatpush1.bf16.xpose.msra.mxu0 0
    %715 = vmatprep.subr.bf16.mxu0 0
    %716 = vmatpush1.bf16.xpose.msra.mxu0 0
    %717 = vmatprep.subr.bf16.mxu0 0
    %718 = vmatpush1.bf16.xpose.msra.mxu0 0
    %719 = vmatprep.subr.bf16.mxu0 0
    %720 = vmatpush1.bf16.xpose.msra.mxu0 0
    %721 = vmatprep.subr.bf16.mxu0 0
    %722 = vmatpush1.bf16.xpose.msra.mxu0 0
    %723 = vmatprep.subr.bf16.mxu0 0
    %724 = vmatpush1.bf16.xpose.msra.mxu0 0
    %725 = vmatprep.subr.bf16.mxu0 0
    %726 = vmatpush1.bf16.xpose.msra.mxu0 0
    %727 = vmatprep.subr.bf16.mxu0 0
    %728 = vmatpush1.bf16.xpose.msra.mxu0 0
    %729 = vmatprep.mubr.bf16.mxu0 0
    %730 = vmatmul.mubr.bf16.gmra.mrb[0].mxu0 %v332
    %v731 = vpop.f32.mrb[0].mxu0
    %v732 = vadd.f32 0.0, %v731
    %v733 = vpop.f32.mrb[0].mxu0
    %v734 = vpop.f32.mrb[0].mxu0
    %v735 = vpop.f32.mrb[0].mxu0
    %736 = vdwg.mxu0
    %v737 = vmul.f32 %v732, 0.35355338
    %v738 = vsel %vm331, %v737, -1e+30
    %v739 = vsel %vm386, %v738, -inf
    %740 = vmax.xlane.f32.xlu0 %v739
    %v741 = vpop.xlane.xlu0 %740
    %v742 = vsub.f32 %v738, %v741
    %v743 = vmul.f32 %v742, 1.442695
    %v744 = vpow.pop %v743
    %v745 = vsel %vm386, %v744, 0.0
    %746 = vadd.xlane.f32.xlu0 %v745
    %v747 = vpop.xlane.xlu0 %746
    %v748 = vrcp.pop %v747
    %v749 = vmul.f32 %v744, %v748
    %vm750 = vcmp.ge.s32.totalorder %v330, 24
    %vm751 = vcmp.lt.s32.totalorder %v330, 32
    %vm752 = vmand %vm750, %vm751
    %v753 = vsel %vm752, 1, 0
    %vm754 = vcmp.eq.s32.totalorder %v753, 1
    %v755 = vsel %vm754, %v310, 0.0
    %v756 = vpack.c.bf16 %v755, %v755
    %v757 = vpack.c.bf16 %v749, %v749
    %v759 = vsel %vm386, %v757, 0
    %v762 = vsel %vm479, %v756, 0
    %764 = vmatprep.subr.bf16.mxu0 0
    %765 = vmatpush1.bf16.msra.mxu0 %v762
    %766 = vmatprep.subr.bf16.mxu0 0
    %767 = vmatpush1.bf16.msra.mxu0 0
    %768 = vmatprep.subr.bf16.mxu0 0
    %769 = vmatpush1.bf16.msra.mxu0 0
    %770 = vmatprep.subr.bf16.mxu0 0
    %771 = vmatpush1.bf16.msra.mxu0 0
    %772 = vmatprep.subr.bf16.mxu0 0
    %773 = vmatpush1.bf16.msra.mxu0 0
    %774 = vmatprep.subr.bf16.mxu0 0
    %775 = vmatpush1.bf16.msra.mxu0 0
    %776 = vmatprep.subr.bf16.mxu0 0
    %777 = vmatpush1.bf16.msra.mxu0 0
    %778 = vmatprep.subr.bf16.mxu0 0
    %779 = vmatpush1.bf16.msra.mxu0 0
    %780 = vmatprep.subr.bf16.mxu0 0
    %781 = vmatpush1.bf16.msra.mxu0 0
    %782 = vmatprep.subr.bf16.mxu0 0
    %783 = vmatpush1.bf16.msra.mxu0 0
    %784 = vmatprep.subr.bf16.mxu0 0
    %785 = vmatpush1.bf16.msra.mxu0 0
    %786 = vmatprep.subr.bf16.mxu0 0
    %787 = vmatpush1.bf16.msra.mxu0 0
    %788 = vmatprep.subr.bf16.mxu0 0
    %789 = vmatpush1.bf16.msra.mxu0 0
    %790 = vmatprep.subr.bf16.mxu0 0
    %791 = vmatpush1.bf16.msra.mxu0 0
    %792 = vmatprep.subr.bf16.mxu0 0
    %793 = vmatpush1.bf16.msra.mxu0 0
    %794 = vmatprep.subr.bf16.mxu0 0
    %795 = vmatpush1.bf16.msra.mxu0 0
    %796 = vmatprep.mubr.bf16.mxu0 0
    %797 = vmatmul.mubr.bf16.gmra.mrb[0].mxu0 %v759
    %v798 = vpop.f32.mrb[0].mxu0
    %v799 = vadd.f32 0.0, %v798
    %v800 = vpop.f32.mrb[0].mxu0
    %v801 = vpop.f32.mrb[0].mxu0
    %v802 = vpop.f32.mrb[0].mxu0
    %803 = vdwg.mxu0
    %v804 = vadd.f32 %v686, %v799
    %v805 = vpack.c.bf16 %v804, %v804
    %v806 = vld [vmem:[#allocation7] sm:$0xf]
    %v807 = vld [vmem:[#allocation7 + $0x4] sm:$0xf]
    %v808 = vld [vmem:[#allocation7 + $0x8] sm:$0xf]
    %v809 = vld [vmem:[#allocation7 + $0xc] sm:$0xf]
    %v810 = vld [vmem:[#allocation7 + $0x10] sm:$0xf]
    %v811 = vld [vmem:[#allocation7 + $0x14] sm:$0xf]
    %v812 = vld [vmem:[#allocation7 + $0x18] sm:$0xf]
    %v813 = vld [vmem:[#allocation7 + $0x1c] sm:$0xf]
    %v814 = vld [vmem:[#allocation7 + $0x20] sm:$0xf]
    %v815 = vld [vmem:[#allocation7 + $0x24] sm:$0xf]
    %v816 = vld [vmem:[#allocation7 + $0x28] sm:$0xf]
    %v817 = vld [vmem:[#allocation7 + $0x2c] sm:$0xf]
    %v818 = vld [vmem:[#allocation7 + $0x30] sm:$0xf]
    %v819 = vld [vmem:[#allocation7 + $0x34] sm:$0xf]
    %v820 = vld [vmem:[#allocation7 + $0x38] sm:$0xf]
    %v821 = vld [vmem:[#allocation7 + $0x3c] sm:$0xf]
    %v838 = vunpack.c.l.b16 %v806
    %v839 = vunpack.c.l.b16 %v807
    %v840 = vunpack.c.l.b16 %v808
    %v841 = vunpack.c.l.b16 %v809
    %v842 = vunpack.c.l.b16 %v810
    %v843 = vunpack.c.l.b16 %v811
    %v844 = vunpack.c.l.b16 %v812
    %v845 = vunpack.c.l.b16 %v813
    %v846 = vunpack.c.l.b16 %v814
    %v847 = vunpack.c.l.b16 %v815
    %v848 = vunpack.c.l.b16 %v816
    %v849 = vunpack.c.l.b16 %v817
    %v850 = vunpack.c.l.b16 %v818
    %v851 = vunpack.c.l.b16 %v819
    %v852 = vunpack.c.l.b16 %v820
    %v853 = vunpack.c.l.b16 %v821
    %v854 = vpack.c.b16 %v839, %v838
    %v855 = vpack.c.b16 %v841, %v840
    %v856 = vpack.c.b16 %v843, %v842
    %v857 = vpack.c.b16 %v845, %v844
    %v858 = vpack.c.b16 %v847, %v846
    %v859 = vpack.c.b16 %v849, %v848
    %v860 = vpack.c.b16 %v851, %v850
    %v861 = vpack.c.b16 %v853, %v852
    %870 = vmatprep.subr.bf16.mxu0 0
    %871 = vmatpush1.bf16.msra.mxu0 %v854
    %872 = vmatprep.subr.bf16.mxu0 0
    %873 = vmatpush1.bf16.msra.mxu0 %v855
    %874 = vmatprep.subr.bf16.mxu0 0
    %875 = vmatpush1.bf16.msra.mxu0 %v856
    %876 = vmatprep.subr.bf16.mxu0 0
    %877 = vmatpush1.bf16.msra.mxu0 %v857
    %878 = vmatprep.subr.bf16.mxu0 0
    %879 = vmatpush1.bf16.msra.mxu0 %v858
    %880 = vmatprep.subr.bf16.mxu0 0
    %881 = vmatpush1.bf16.msra.mxu0 %v859
    %882 = vmatprep.subr.bf16.mxu0 0
    %883 = vmatpush1.bf16.msra.mxu0 %v860
    %884 = vmatprep.subr.bf16.mxu0 0
    %885 = vmatpush1.bf16.msra.mxu0 %v861
    %886 = vmatprep.subr.bf16.mxu0 0
    %887 = vmatpush1.bf16.msra.mxu0 0
    %888 = vmatprep.subr.bf16.mxu0 0
    %889 = vmatpush1.bf16.msra.mxu0 0
    %890 = vmatprep.subr.bf16.mxu0 0
    %891 = vmatpush1.bf16.msra.mxu0 0
    %892 = vmatprep.subr.bf16.mxu0 0
    %893 = vmatpush1.bf16.msra.mxu0 0
    %894 = vmatprep.subr.bf16.mxu0 0
    %895 = vmatpush1.bf16.msra.mxu0 0
    %896 = vmatprep.subr.bf16.mxu0 0
    %897 = vmatpush1.bf16.msra.mxu0 0
    %898 = vmatprep.subr.bf16.mxu0 0
    %899 = vmatpush1.bf16.msra.mxu0 0
    %900 = vmatprep.subr.bf16.mxu0 0
    %901 = vmatpush1.bf16.msra.mxu0 0
    %902 = vmatprep.mubr.bf16.mxu0 0
    %903 = vmatmul.mubr.bf16.gmra.mrb[0].mxu0 %v805
    %v904 = vpop.f32.mrb[0].mxu0
    %v905 = vadd.f32 0.0, %v904
    %v906 = vpop.f32.mrb[0].mxu0
    %v907 = vpop.f32.mrb[0].mxu0
    %v908 = vpop.f32.mrb[0].mxu0
    %909 = vdwg.mxu0
    %910 = vst [vmem:[#allocation10] sm:$0xff] %v905
    // Predicated region
    $region38: #{tpu_custom_call.1} parent=1 // pred_check
      _
    $region39: #{tpu_custom_call.1} parent=1 // pred_check_branch
      %912 = sbr.rel (0) target = $region41
    $region40: #{tpu_custom_call.1} parent=1 // pred_region
      %s914 = ssub.s32 128, 128
      %915 = vsyncadd [#allocation4], %s914
      %s917 = sshll.u32 [#allocation10], 4
      %s918 = int_to_ptr.vmem [resolvable:$true] %s917
      %920 = dma.vmem_to_hbm [thread:$0]  %s918, 128, %s5, [#allocation4]
    $region41: #{tpu_custom_call.1} parent=1 // pred_fallthru
      _
    // Predicated region
    $region42: #{tpu_custom_call.1} parent=1 // pred_check
      _
    $region43: #{tpu_custom_call.1} parent=1 // pred_check_branch
      %922 = sbr.rel (0) target = $region45
    $region44: #{tpu_custom_call.1} parent=1 // pred_region
      %923 = dma.done [#allocation4], 128
    $region45: #{tpu_custom_call.1} parent=1 // pred_fallthru
      _
    %924 = vsyncpa [#allocation3], 1
    %925 = vsyncpa [#allocation6], 1
    %926 = vsyncpa [#allocation9], 1
    %927 = vsyncpa [#allocation4], 1

</llo_original>
